<compile_context>
chip_gen: v6e
topology: v6e:2x2x1
jax: 0.10.0
libtpu: 0.0.40
codegen_flags: <defaults>
</compile_context>

<pallas_src>
import jax
import jax.numpy as jnp
from jax.experimental import pallas as pl
from jax.experimental.pallas import tpu as pltpu

# ------------------------- small, module-consistent sizes -------------------------
B = 2            # batch
T = 32           # max_time (encoder length)
DPREV = 128      # prev_dec_dim   (1024 in the original module)
ADIM = 64        # attention_dim
NFILT = 32       # attention_location_n_filters
K = 31           # attention_location_kernel_size
PAD = (K - 1) // 2
MASKED = -1e30   # stands in for the module's -inf masked_score


# --------------------------------- Pallas kernel -----------------------------------
def attention_kernel(prev_ref, mem_ref, s_ref, mask_ref,
                     wq_ref, wloc_ref, v_ref, out_ref):
    """Fused Attention forward.

    prev_ref: (B, DPREV)     previous decoder output
    mem_ref : (B, T, ADIM)   processed encoder memory
    s_ref   : (B, T, 2K)     im2col'd attention_weights_cat (zero padded in time)
    mask_ref: (B, T)         1.0 = valid, 0.0 = padded
    wq_ref  : (DPREV, ADIM)  prev_dec_layer weight (pre-transposed)
    wloc_ref: (2K, ADIM)     location conv (x) location dense, folded
    v_ref   : (1, ADIM)      v weight
    out_ref : (B, T)         attention weights (softmax over T)
    """
    # query projection -> (B, A): one MXU push shared by every timestep
    q = jnp.dot(prev_ref[...], wq_ref[...], preferred_element_type=jnp.float32)

    # location branch: Conv1d + Linear folded into a single (B*T, 2K) @ (2K, A) matmul
    s2 = s_ref[...].reshape(B * T, 2 * K)
    loc = jnp.dot(s2, wloc_ref[...], preferred_element_type=jnp.float32)
    loc = loc.reshape(B, T, ADIM)

    # energies = v . tanh(q + loc + memory)
    e = jnp.tanh(q[:, None, :] + loc + mem_ref[...])                    # (B, T, A)  (EUP)
    energies = jnp.sum(e * v_ref[...].reshape(1, 1, ADIM), axis=-1)     # (B, T), T on lanes

    # mask + softmax over T (lane axis)
    energies = jnp.where(mask_ref[...] > 0.5, energies, MASKED)
    m = jnp.max(energies, axis=-1, keepdims=True)
    p = jnp.exp(energies - m)
    out_ref[...] = p / jnp.sum(p, axis=-1, keepdims=True)


# ------------------------------------ wrapper ---------------------------------------
def _full_spec(shape):
    return pl.BlockSpec(shape, lambda i: (0,) * len(shape))


def prep_params(p):
    """Fold PyTorch-convention weights into kernel-ready form (f32, done once)."""
    # location_dense(location_conv(x)):  Wloc[k*2+c, a] = sum_f conv_w[f,c,k] * dense_w[a,f]
    wloc = jnp.einsum('fck,af->kca', p['w_conv'], p['w_dense']).reshape(2 * K, ADIM)
    return dict(wq=p['w_query'].T, wloc=wloc, v=p['w_v'])


@jax.jit
def attention_forward(prev_dec, memory, aw_cat, mask, kp):
    # Tiny im2col of the (B, 2, T) attention-weights signal (a few KB; handled by XLA).
    aw_t = jnp.swapaxes(aw_cat, 1, 2)                                   # (B, T, 2)
    aw_tp = jnp.pad(aw_t, ((0, 0), (PAD, PAD), (0, 0)))                 # (B, T+2PAD, 2)
    s = jnp.concatenate([aw_tp[:, k:k + T, :] for k in range(K)], axis=-1)  # (B, T, 2K)

    args = (prev_dec, memory, s, mask, kp['wq'], kp['wloc'], kp['v'])
    return pl.pallas_call(
        attention_kernel,
        out_shape=jax.ShapeDtypeStruct((B, T), jnp.float32),
        grid=(1,),
        in_specs=[_full_spec(a.shape) for a in args],
        out_specs=_full_spec((B, T)),
        compiler_params=pltpu.CompilerParams(dimension_semantics=("arbitrary",)),
    )(*args)
    # TODO(synk): at production sizes (T in the hundreds, B large) tile over batch/time
    # with a 'parallel' grid axis and set vmem_limit_bytes instead of full-array blocks.


# ------------------------------- parameters ----------------------------------------
def init_params(key):
    ks = jax.random.split(key, 4)
    u = lambda k, shape, s=0.15: jax.random.uniform(k, shape, jnp.float32, -s, s)
    return dict(
        w_query=u(ks[0], (ADIM, DPREV)),   # prev_dec_layer.weight (Linear, no bias)
        w_conv=u(ks[1], (NFILT, 2, K)),    # location_conv.weight  (Conv1d, no bias)
        w_dense=u(ks[2], (ADIM, NFILT)),   # location_dense.weight (Linear, no bias)
        w_v=u(ks[3], (1, ADIM)),           # v.weight              (Linear, no bias)
    )


# ------------------------------- pure-JAX reference ---------------------------------
def reference_forward(prev_dec, memory, aw_cat, mask, p):
    q = prev_dec @ p['w_query'].T                                       # (B, A)
    awp = jnp.pad(aw_cat, ((0, 0), (0, 0), (PAD, PAD)))                 # (B, 2, T+2PAD)
    conv = jnp.zeros((B, NFILT, T), jnp.float32)
    for k in range(K):                                                  # Conv1d(2->F, K)
        conv = conv + jnp.einsum('bct,fc->bft', awp[:, :, k:k + T], p['w_conv'][:, :, k])
    loc = jnp.einsum('bft,af->bta', conv, p['w_dense'])                 # transpose + dense
    e = jnp.tanh(q[:, None, :] + loc + memory)
    energies = jnp.einsum('bta,a->bt', e, p['w_v'][0])
    energies = jnp.where(mask > 0.5, energies, MASKED)
    return jax.nn.softmax(energies, axis=1)


# ------------------------------------ main ------------------------------------------
if __name__ == "__main__":
    key = jax.random.PRNGKey(0)
    k1, k2, k3, kparamkey = jax.random.split(key, 4)

    prev_dec = jax.random.normal(k1, (B, DPREV), jnp.float32)           # decoder state
    memory = jax.random.normal(k2, (B, T, ADIM), jnp.float32)           # processed memory
    prev_w = jax.nn.softmax(jax.random.normal(k3, (B, T), jnp.float32), axis=-1)
    aw_cat = jnp.stack([prev_w, jnp.cumsum(prev_w, axis=-1)], axis=1)   # (B, 2, T)
    lengths = jnp.array([T, 24])
    mask = (jnp.arange(T)[None, :] < lengths[:, None]).astype(jnp.float32)

    params = init_params(kparamkey)
    kparams = prep_params(params)

    out = attention_forward(prev_dec, memory, aw_cat, mask, kparams)
    jax.block_until_ready(out)

    assert out.shape == (B, T)
    ref = reference_forward(prev_dec, memory, aw_cat, mask, params)
    assert jnp.allclose(out, ref, rtol=2e-3, atol=2e-3)
    assert jnp.allclose(jnp.sum(out, axis=1), 1.0, atol=1e-4)           # rows are softmaxed
    assert float(jnp.max(out[1, 24:])) < 1e-6                           # masked -> ~0 weight

    print("KERNEL_OK")
</pallas_src>

<mosaic_0001>
module attributes {stable_mosaic.version = 11 : i64} {
  func.func @attention_kernel(%arg0: i32, %arg1: memref<2x128xf32, #tpu.memory_space<vmem>>, %arg2: memref<2x32x64xf32, #tpu.memory_space<vmem>>, %arg3: memref<2x32x62xf32, #tpu.memory_space<vmem>>, %arg4: memref<2x32xf32, #tpu.memory_space<vmem>>, %arg5: memref<128x64xf32, #tpu.memory_space<vmem>>, %arg6: memref<62x64xf32, #tpu.memory_space<vmem>>, %arg7: memref<1x64xf32, #tpu.memory_space<vmem>>, %arg8: memref<2x32xf32, #tpu.memory_space<vmem>>) attributes {dimension_semantics = [#tpu.dimension_semantics<arbitrary>], iteration_bounds = array<i64: 1>, scalar_prefetch = 0 : i64, scratch_operands = 0 : i64, tpu.core_type = #tpu.core_type<tc>, window_params = [{pipeline_mode = #tpu.pipeline_mode<synchronous>, transform_indices = @transform_0, window_bounds = array<i64: 2, 128>}, {pipeline_mode = #tpu.pipeline_mode<synchronous>, transform_indices = @transform_1, window_bounds = array<i64: 2, 32, 64>}, {pipeline_mode = #tpu.pipeline_mode<synchronous>, transform_indices = @transform_2, window_bounds = array<i64: 2, 32, 62>}, {pipeline_mode = #tpu.pipeline_mode<synchronous>, transform_indices = @transform_3, window_bounds = array<i64: 2, 32>}, {pipeline_mode = #tpu.pipeline_mode<synchronous>, transform_indices = @transform_4, window_bounds = array<i64: 128, 64>}, {pipeline_mode = #tpu.pipeline_mode<synchronous>, transform_indices = @transform_5, window_bounds = array<i64: 62, 64>}, {pipeline_mode = #tpu.pipeline_mode<synchronous>, transform_indices = @transform_6, window_bounds = array<i64: 1, 64>}, {pipeline_mode = #tpu.pipeline_mode<synchronous>, transform_indices = @transform_7, window_bounds = array<i64: 2, 32>}]} {
    %c0 = arith.constant 0 : index
    %c0_0 = arith.constant 0 : index
    %0 = vector.load %arg1[%c0, %c0_0] : memref<2x128xf32, #tpu.memory_space<vmem>>, vector<2x128xf32>
    %c0_1 = arith.constant 0 : index
    %c0_2 = arith.constant 0 : index
    %1 = vector.load %arg5[%c0_1, %c0_2] : memref<128x64xf32, #tpu.memory_space<vmem>>, vector<128x64xf32>
    %cst = arith.constant dense<0.000000e+00> : vector<2x64xf32>
    %2 = tpu.matmul %0, %1, %cst {dimension_numbers = #tpu.dot_dimension_numbers<[1], [0], [0], [1], [0, 0, 1, 1], [], []>} : vector<2x128xf32>, vector<128x64xf32>, vector<2x64xf32> -> vector<2x64xf32>
    %c0_3 = arith.constant 0 : index
    %c0_4 = arith.constant 0 : index
    %c0_5 = arith.constant 0 : index
    %3 = vector.load %arg3[%c0_3, %c0_4, %c0_5] : memref<2x32x62xf32, #tpu.memory_space<vmem>>, vector<2x32x62xf32>
    %4 = vector.shape_cast %3 : vector<2x32x62xf32> to vector<64x62xf32>
    %c0_6 = arith.constant 0 : index
    %c0_7 = arith.constant 0 : index
    %5 = vector.load %arg6[%c0_6, %c0_7] : memref<62x64xf32, #tpu.memory_space<vmem>>, vector<62x64xf32>
    %cst_8 = arith.constant dense<0.000000e+00> : vector<64x64xf32>
    %6 = tpu.matmul %4, %5, %cst_8 {dimension_numbers = #tpu.dot_dimension_numbers<[1], [0], [0], [1], [0, 0, 1, 1], [], []>} : vector<64x62xf32>, vector<62x64xf32>, vector<64x64xf32> -> vector<64x64xf32>
    %7 = vector.shape_cast %6 : vector<64x64xf32> to vector<2x32x64xf32>
    %8 = vector.shape_cast %2 : vector<2x64xf32> to vector<2x1x64xf32>
    %9 = vector.broadcast %8 : vector<2x1x64xf32> to vector<2x32x64xf32>
    %10 = arith.addf %9, %7 : vector<2x32x64xf32>
    %c0_9 = arith.constant 0 : index
    %c0_10 = arith.constant 0 : index
    %c0_11 = arith.constant 0 : index
    %11 = vector.load %arg2[%c0_9, %c0_10, %c0_11] : memref<2x32x64xf32, #tpu.memory_space<vmem>>, vector<2x32x64xf32>
    %12 = arith.addf %10, %11 : vector<2x32x64xf32>
    %13 = math.tanh %12 : vector<2x32x64xf32>
    %c0_12 = arith.constant 0 : index
    %c0_13 = arith.constant 0 : index
    %14 = vector.load %arg7[%c0_12, %c0_13] : memref<1x64xf32, #tpu.memory_space<vmem>>, vector<1x64xf32>
    %15 = vector.shape_cast %14 : vector<1x64xf32> to vector<1x1x64xf32>
    %16 = vector.broadcast %15 : vector<1x1x64xf32> to vector<2x32x64xf32>
    %17 = arith.mulf %13, %16 : vector<2x32x64xf32>
    %cst_14 = arith.constant dense<0.000000e+00> : vector<2x32xf32>
    %18 = vector.multi_reduction <add>, %17, %cst_14 [2] : vector<2x32x64xf32> to vector<2x32xf32>
    %c0_15 = arith.constant 0 : index
    %c0_16 = arith.constant 0 : index
    %19 = vector.load %arg4[%c0_15, %c0_16] : memref<2x32xf32, #tpu.memory_space<vmem>>, vector<2x32xf32>
    %cst_17 = arith.constant 5.000000e-01 : f32
    %20 = vector.broadcast %cst_17 : f32 to vector<2x32xf32>
    %21 = arith.cmpf ogt, %19, %20 : vector<2x32xf32>
    %cst_18 = arith.constant -1.000000e+30 : f32
    %22 = vector.broadcast %cst_18 : f32 to vector<2x32xf32>
    %23 = arith.select %21, %18, %22 : vector<2x32xi1>, vector<2x32xf32>
    %cst_19 = arith.constant dense<0xFF800000> : vector<2xf32>
    %24 = vector.multi_reduction <maximumf>, %23, %cst_19 [1] : vector<2x32xf32> to vector<2xf32>
    %25 = vector.shape_cast %24 : vector<2xf32> to vector<2x1xf32>
    %26 = vector.broadcast %25 : vector<2x1xf32> to vector<2x32xf32>
    %27 = arith.subf %23, %26 : vector<2x32xf32>
    %28 = math.exp %27 : vector<2x32xf32>
    %cst_20 = arith.constant dense<0.000000e+00> : vector<2xf32>
    %29 = vector.multi_reduction <add>, %28, %cst_20 [1] : vector<2x32xf32> to vector<2xf32>
    %30 = vector.shape_cast %29 : vector<2xf32> to vector<2x1xf32>
    %31 = vector.broadcast %30 : vector<2x1xf32> to vector<2x32xf32>
    %32 = arith.divf %28, %31 : vector<2x32xf32>
    %c0_21 = arith.constant 0 : index
    %c0_22 = arith.constant 0 : index
    %33 = vector.load %arg8[%c0_21, %c0_22] : memref<2x32xf32, #tpu.memory_space<vmem>>, vector<2x32xf32>
    tpu.vector_store %arg8[%c0_21, %c0_22], %32 {strides = array<i32>} : memref<2x32xf32, #tpu.memory_space<vmem>>, vector<2x32xf32>,
    return
  }
  func.func @transform_0(%arg0: i32) -> (i32, i32) {
    %c0_i32 = arith.constant 0 : i32
    %c0_i32_0 = arith.constant 0 : i32
    %c0_i32_1 = arith.constant 0 : i32
    return %c0_i32, %c0_i32_0 : i32, i32
  }
  func.func @transform_1(%arg0: i32) -> (i32, i32, i32) {
    %c0_i32 = arith.constant 0 : i32
    %c0_i32_0 = arith.constant 0 : i32
    %c0_i32_1 = arith.constant 0 : i32
    %c0_i32_2 = arith.constant 0 : i32
    return %c0_i32, %c0_i32_0, %c0_i32_1 : i32, i32, i32
  }
  func.func @transform_2(%arg0: i32) -> (i32, i32, i32) {
    %c0_i32 = arith.constant 0 : i32
    %c0_i32_0 = arith.constant 0 : i32
    %c0_i32_1 = arith.constant 0 : i32
    %c0_i32_2 = arith.constant 0 : i32
    return %c0_i32, %c0_i32_0, %c0_i32_1 : i32, i32, i32
  }
  func.func @transform_3(%arg0: i32) -> (i32, i32) {
    %c0_i32 = arith.constant 0 : i32
    %c0_i32_0 = arith.constant 0 : i32
    %c0_i32_1 = arith.constant 0 : i32
    return %c0_i32, %c0_i32_0 : i32, i32
  }
  func.func @transform_4(%arg0: i32) -> (i32, i32) {
    %c0_i32 = arith.constant 0 : i32
    %c0_i32_0 = arith.constant 0 : i32
    %c0_i32_1 = arith.constant 0 : i32
    return %c0_i32, %c0_i32_0 : i32, i32
  }
  func.func @transform_5(%arg0: i32) -> (i32, i32) {
    %c0_i32 = arith.constant 0 : i32
    %c0_i32_0 = arith.constant 0 : i32
    %c0_i32_1 = arith.constant 0 : i32
    return %c0_i32, %c0_i32_0 : i32, i32
  }
  func.func @transform_6(%arg0: i32) -> (i32, i32) {
    %c0_i32 = arith.constant 0 : i32
    %c0_i32_0 = arith.constant 0 : i32
    %c0_i32_1 = arith.constant 0 : i32
    return %c0_i32, %c0_i32_0 : i32, i32
  }
  func.func @transform_7(%arg0: i32) -> (i32, i32) {
    %c0_i32 = arith.constant 0 : i32
    %c0_i32_0 = arith.constant 0 : i32
    %c0_i32_1 = arith.constant 0 : i32
    return %c0_i32, %c0_i32_0 : i32, i32
  }
}

</mosaic_0001>

<llo_original>
// kernel: attention_forward.1
$region0: #{attention_forward.1}
  #allocation0 [shape = 'u32[]', space=smem, size = 0x4, offset = 0x4, fixed_abs, tag = 'smem constant byte address 0x4 - core index']
  #allocation1 [shape = 'u32[144,128]{1,0:T(1,128)}', space=vmem, size = 0x12000, scoped, tag = 'internal scratch']
  %s0 = inlined_call_operand.vmem [shape: f32[2,128], index: 0, kind: input, shape index: {}]
  %s1 = inlined_call_operand.vmem [shape: f32[2,32,64], index: 1, kind: input, shape index: {}]
  %s2 = inlined_call_operand.vmem [shape: f32[2,32,62], index: 2, kind: input, shape index: {}]
  %s3 = inlined_call_operand.vmem [shape: f32[2,32], index: 3, kind: input, shape index: {}]
  %s4 = inlined_call_operand.vmem [shape: f32[128,64], index: 4, kind: input, shape index: {}]
  %s5 = inlined_call_operand.vmem [shape: f32[62,64], index: 5, kind: input, shape index: {}]
  %s6 = inlined_call_operand.vmem [shape: f32[1,64], index: 6, kind: input, shape index: {}]
  %s7 = inlined_call_operand.hbm [shape: f32[2,32], index: 7, kind: output, shape index: {}]
  %s8 = sld [smem:[#allocation0]]
  $region38: #{attention_forward.1} parent=0
    _
  %s10 = ssub.s32 1, %s8
  %s11 = scalar_select 0, %s10, %s8
  $region1: #{attention_forward.1} parent=0
    #allocation2 [shape = 'u8[1024]{0}', space=vmem, size = 0x400, scoped, tag = 'output window, operand 0, single buffered']
    #allocation3 [shape = 's32[1]{0}', space=sflag, size = 0x4, scoped, tag = 'scoped memory for attention_forward.1']
    %12 = vsyncpa [#allocation3], 0
    // Predicated region
    $region2: #{attention_forward.1} parent=1 // pred_check
      _
    $region3: #{attention_forward.1} parent=1 // pred_check_branch
      %14 = sbr.rel (0) target = $region5
    $region4: #{attention_forward.1} parent=1 // pred_region
      _
    $region5: #{attention_forward.1} parent=1 // pred_fallthru
      _
    // Predicated region
    $region6: #{attention_forward.1} parent=1 // pred_check
      _
    $region7: #{attention_forward.1} parent=1 // pred_check_branch
      %16 = sbr.rel (0) target = $region9
    $region8: #{attention_forward.1} parent=1 // pred_region
      _
    $region9: #{attention_forward.1} parent=1 // pred_fallthru
      _
    // Predicated region
    $region10: #{attention_forward.1} parent=1 // pred_check
      _
    $region11: #{attention_forward.1} parent=1 // pred_check_branch
      %18 = sbr.rel (0) target = $region13
    $region12: #{attention_forward.1} parent=1 // pred_region
      _
    $region13: #{attention_forward.1} parent=1 // pred_fallthru
      _
    // Predicated region
    $region14: #{attention_forward.1} parent=1 // pred_check
      _
    $region15: #{attention_forward.1} parent=1 // pred_check_branch
      %20 = sbr.rel (0) target = $region17
    $region16: #{attention_forward.1} parent=1 // pred_region
      _
    $region17: #{attention_forward.1} parent=1 // pred_fallthru
      _
    // Predicated region
    $region18: #{attention_forward.1} parent=1 // pred_check
      _
    $region19: #{attention_forward.1} parent=1 // pred_check_branch
      %22 = sbr.rel (0) target = $region21
    $region20: #{attention_forward.1} parent=1 // pred_region
      _
    $region21: #{attention_forward.1} parent=1 // pred_fallthru
      _
    // Predicated region
    $region22: #{attention_forward.1} parent=1 // pred_check
      _
    $region23: #{attention_forward.1} parent=1 // pred_check_branch
      %24 = sbr.rel (0) target = $region25
    $region24: #{attention_forward.1} parent=1 // pred_region
      _
    $region25: #{attention_forward.1} parent=1 // pred_fallthru
      _
    // Predicated region
    $region26: #{attention_forward.1} parent=1 // pred_check
      _
    $region27: #{attention_forward.1} parent=1 // pred_check_branch
      %26 = sbr.rel (0) target = $region29
    $region28: #{attention_forward.1} parent=1 // pred_region
      _
    $region29: #{attention_forward.1} parent=1 // pred_fallthru
      _
    %v27 = vld [vmem:[%s0] sm:$0x3]
    %v28 = vld [vmem:[%s4] sm:$0xff]
    %v29 = vld [vmem:[%s4 + $0x8] sm:$0xff]
    %v30 = vld [vmem:[%s4 + $0x10] sm:$0xff]
    %v31 = vld [vmem:[%s4 + $0x18] sm:$0xff]
    %v32 = vld [vmem:[%s4 + $0x20] sm:$0xff]
    %v33 = vld [vmem:[%s4 + $0x28] sm:$0xff]
    %v34 = vld [vmem:[%s4 + $0x30] sm:$0xff]
    %v35 = vld [vmem:[%s4 + $0x38] sm:$0xff]
    %v36 = vld [vmem:[%s4 + $0x40] sm:$0xff]
    %v37 = vld [vmem:[%s4 + $0x48] sm:$0xff]
    %v38 = vld [vmem:[%s4 + $0x50] sm:$0xff]
    %v39 = vld [vmem:[%s4 + $0x58] sm:$0xff]
    %v40 = vld [vmem:[%s4 + $0x60] sm:$0xff]
    %v41 = vld [vmem:[%s4 + $0x68] sm:$0xff]
    %v42 = vld [vmem:[%s4 + $0x70] sm:$0xff]
    %v43 = vld [vmem:[%s4 + $0x78] sm:$0xff]
    %44 = vmatprep.subr.mxu0 0.0
    %45 = vmatpush1.msra.mxu0 %v43
    %46 = vmatprep.subr.mxu0 0.0
    %47 = vmatpush1.msra.mxu0 %v42
    %48 = vmatprep.subr.mxu0 0.0
    %49 = vmatpush1.msra.mxu0 %v41
    %50 = vmatprep.subr.mxu0 0.0
    %51 = vmatpush1.msra.mxu0 %v40
    %52 = vmatprep.subr.mxu0 0.0
    %53 = vmatpush1.msra.mxu0 %v39
    %54 = vmatprep.subr.mxu0 0.0
    %55 = vmatpush1.msra.mxu0 %v38
    %56 = vmatprep.subr.mxu0 0.0
    %57 = vmatpush1.msra.mxu0 %v37
    %58 = vmatprep.subr.mxu0 0.0
    %59 = vmatpush1.msra.mxu0 %v36
    %60 = vmatprep.subr.mxu0 0.0
    %61 = vmatpush1.msra.mxu0 %v35
    %62 = vmatprep.subr.mxu0 0.0
    %63 = vmatpush1.msra.mxu0 %v34
    %64 = vmatprep.subr.mxu0 0.0
    %65 = vmatpush1.msra.mxu0 %v33
    %66 = vmatprep.subr.mxu0 0.0
    %67 = vmatpush1.msra.mxu0 %v32
    %68 = vmatprep.subr.mxu0 0.0
    %69 = vmatpush1.msra.mxu0 %v31
    %70 = vmatprep.subr.mxu0 0.0
    %71 = vmatpush1.msra.mxu0 %v30
    %72 = vmatprep.subr.mxu0 0.0
    %73 = vmatpush1.msra.mxu0 %v29
    %74 = vmatprep.subr.mxu0 0.0
    %75 = vmatpush1.msra.mxu0 %v28
    %76 = vmatprep.subr.mxu0 0.0
    %77 = vmatpush2.msra.mxu0 0.0
    %78 = vmatprep.subr.mxu0 0.0
    %79 = vmatpush2.msra.mxu0 0.0
    %80 = vmatprep.subr.mxu0 0.0
    %81 = vmatpush2.msra.mxu0 0.0
    %82 = vmatprep.subr.mxu0 0.0
    %83 = vmatpush2.msra.mxu0 0.0
    %84 = vmatprep.subr.mxu0 0.0
    %85 = vmatpush2.msra.mxu0 0.0
    %86 = vmatprep.subr.mxu0 0.0
    %87 = vmatpush2.msra.mxu0 0.0
    %88 = vmatprep.subr.mxu0 0.0
    %89 = vmatpush2.msra.mxu0 0.0
    %90 = vmatprep.subr.mxu0 0.0
    %91 = vmatpush2.msra.mxu0 0.0
    %92 = vmatprep.subr.mxu0 0.0
    %93 = vmatpush2.msra.mxu0 0.0
    %94 = vmatprep.subr.mxu0 0.0
    %95 = vmatpush2.msra.mxu0 0.0
    %96 = vmatprep.subr.mxu0 0.0
    %97 = vmatpush2.msra.mxu0 0.0
    %98 = vmatprep.subr.mxu0 0.0
    %99 = vmatpush2.msra.mxu0 0.0
    %100 = vmatprep.subr.mxu0 0.0
    %101 = vmatpush2.msra.mxu0 0.0
    %102 = vmatprep.subr.mxu0 0.0
    %103 = vmatpush2.msra.mxu0 0.0
    %104 = vmatprep.subr.mxu0 0.0
    %105 = vmatpush2.msra.mxu0 0.0
    %106 = vmatprep.subr.mxu0 0.0
    %107 = vmatpush2.msra.mxu0 0.0
    %108 = vmatprep.mubr.f32.mxu0 0.0
    %109 = vmatmul.mubr.f32.gmra.mxu0 %v27
    %v110 = vpop.f32.mrf.mxu0
    %v111 = vadd.f32 0.0, %v110
    %v112 = vpop.f32.mrf.mxu0
    %113 = vdwg.mxu0
    %v114 = vld [vmem:[%s2] sm:$0xff]
    %v115 = vld [vmem:[%s2 + $0x8] sm:$0xff]
    %v116 = vld [vmem:[%s2 + $0x10] sm:$0xff]
    %v117 = vld [vmem:[%s2 + $0x18] sm:$0xff]
    %v118 = vld [vmem:[%s2 + $0x20] sm:$0xff]
    %v119 = vld [vmem:[%s2 + $0x28] sm:$0xff]
    %v120 = vld [vmem:[%s2 + $0x30] sm:$0xff]
    %v121 = vld [vmem:[%s2 + $0x38] sm:$0xff]
    %v122 = vld [vmem:[%s5] sm:$0xff]
    %v123 = vld [vmem:[%s5 + $0x8] sm:$0xff]
    %v124 = vld [vmem:[%s5 + $0x10] sm:$0xff]
    %v125 = vld [vmem:[%s5 + $0x18] sm:$0xff]
    %v126 = vld [vmem:[%s5 + $0x20] sm:$0xff]
    %v127 = vld [vmem:[%s5 + $0x28] sm:$0xff]
    %v128 = vld [vmem:[%s5 + $0x30] sm:$0xff]
    %v129 = vld [vmem:[%s5 + $0x38] sm:$0x3f]
    %vm130 = vcmask 506880
    %v132 = vsel %vm130, %v114, 0
    %v135 = vsel %vm130, %v115, 0
    %v138 = vsel %vm130, %v116, 0
    %v141 = vsel %vm130, %v117, 0
    %v144 = vsel %vm130, %v118, 0
    %v147 = vsel %vm130, %v119, 0
    %v150 = vsel %vm130, %v120, 0
    %v153 = vsel %vm130, %v121, 0
    %vm155 = vcmask 1045504
    %v157 = vsel %vm155, %v129, 0
    %159 = vmatprep.subr.mxu0 0.0
    %160 = vmatpush1.msra.mxu0 0.0
    %161 = vmatprep.subr.mxu0 0.0
    %162 = vmatpush1.msra.mxu0 0.0
    %163 = vmatprep.subr.mxu0 0.0
    %164 = vmatpush1.msra.mxu0 0.0
    %165 = vmatprep.subr.mxu0 0.0
    %166 = vmatpush1.msra.mxu0 0.0
    %167 = vmatprep.subr.mxu0 0.0
    %168 = vmatpush1.msra.mxu0 0.0
    %169 = vmatprep.subr.mxu0 0.0
    %170 = vmatpush1.msra.mxu0 0.0
    %171 = vmatprep.subr.mxu0 0.0
    %172 = vmatpush1.msra.mxu0 0.0
    %173 = vmatprep.subr.mxu0 0.0
    %174 = vmatpush1.msra.mxu0 0.0
    %175 = vmatprep.subr.mxu0 0.0
    %176 = vmatpush1.msra.mxu0 %v157
    %177 = vmatprep.subr.mxu0 0.0
    %178 = vmatpush1.msra.mxu0 %v128
    %179 = vmatprep.subr.mxu0 0.0
    %180 = vmatpush1.msra.mxu0 %v127
    %181 = vmatprep.subr.mxu0 0.0
    %182 = vmatpush1.msra.mxu0 %v126
    %183 = vmatprep.subr.mxu0 0.0
    %184 = vmatpush1.msra.mxu0 %v125
    %185 = vmatprep.subr.mxu0 0.0
    %186 = vmatpush1.msra.mxu0 %v124
    %187 = vmatprep.subr.mxu0 0.0
    %188 = vmatpush1.msra.mxu0 %v123
    %189 = vmatprep.subr.mxu0 0.0
    %190 = vmatpush1.msra.mxu0 %v122
    %191 = vmatprep.subr.mxu0 0.0
    %192 = vmatpush2.msra.mxu0 0.0
    %193 = vmatprep.subr.mxu0 0.0
    %194 = vmatpush2.msra.mxu0 0.0
    %195 = vmatprep.subr.mxu0 0.0
    %196 = vmatpush2.msra.mxu0 0.0
    %197 = vmatprep.subr.mxu0 0.0
    %198 = vmatpush2.msra.mxu0 0.0
    %199 = vmatprep.subr.mxu0 0.0
    %200 = vmatpush2.msra.mxu0 0.0
    %201 = vmatprep.subr.mxu0 0.0
    %202 = vmatpush2.msra.mxu0 0.0
    %203 = vmatprep.subr.mxu0 0.0
    %204 = vmatpush2.msra.mxu0 0.0
    %205 = vmatprep.subr.mxu0 0.0
    %206 = vmatpush2.msra.mxu0 0.0
    %207 = vmatprep.subr.mxu0 0.0
    %208 = vmatpush2.msra.mxu0 0.0
    %209 = vmatprep.subr.mxu0 0.0
    %210 = vmatpush2.msra.mxu0 0.0
    %211 = vmatprep.subr.mxu0 0.0
    %212 = vmatpush2.msra.mxu0 0.0
    %213 = vmatprep.subr.mxu0 0.0
    %214 = vmatpush2.msra.mxu0 0.0
    %215 = vmatprep.subr.mxu0 0.0
    %216 = vmatpush2.msra.mxu0 0.0
    %217 = vmatprep.subr.mxu0 0.0
    %218 = vmatpush2.msra.mxu0 0.0
    %219 = vmatprep.subr.mxu0 0.0
    %220 = vmatpush2.msra.mxu0 0.0
    %221 = vmatprep.subr.mxu0 0.0
    %222 = vmatpush2.msra.mxu0 0.0
    %223 = vmatprep.mubr.f32.mxu0 0.0
    %224 = vmatmul.mubr.f32.gmra.mxu0 %v132
    %v225 = vpop.f32.mrf.mxu0
    %v226 = vadd.f32 0.0, %v225
    %v227 = vpop.f32.mrf.mxu0
    %228 = vmatprep.mubr.f32.mxu0 0.0
    %229 = vmatmul.mubr.f32.gmra.mxu0 %v135
    %v230 = vpop.f32.mrf.mxu0
    %v231 = vadd.f32 0.0, %v230
    %v232 = vpop.f32.mrf.mxu0
    %233 = vmatprep.mubr.f32.mxu0 0.0
    %234 = vmatmul.mubr.f32.gmra.mxu0 %v138
    %v235 = vpop.f32.mrf.mxu0
    %v236 = vadd.f32 0.0, %v235
    %v237 = vpop.f32.mrf.mxu0
    %238 = vmatprep.mubr.f32.mxu0 0.0
    %239 = vmatmul.mubr.f32.gmra.mxu0 %v141
    %v240 = vpop.f32.mrf.mxu0
    %v241 = vadd.f32 0.0, %v240
    %v242 = vpop.f32.mrf.mxu0
    %243 = vmatprep.mubr.f32.mxu0 0.0
    %244 = vmatmul.mubr.f32.gmra.mxu0 %v144
    %v245 = vpop.f32.mrf.mxu0
    %v246 = vadd.f32 0.0, %v245
    %v247 = vpop.f32.mrf.mxu0
    %248 = vmatprep.mubr.f32.mxu0 0.0
    %249 = vmatmul.mubr.f32.gmra.mxu0 %v147
    %v250 = vpop.f32.mrf.mxu0
    %v251 = vadd.f32 0.0, %v250
    %v252 = vpop.f32.mrf.mxu0
    %253 = vmatprep.mubr.f32.mxu0 0.0
    %254 = vmatmul.mubr.f32.gmra.mxu0 %v150
    %v255 = vpop.f32.mrf.mxu0
    %v256 = vadd.f32 0.0, %v255
    %v257 = vpop.f32.mrf.mxu0
    %258 = vmatprep.mubr.f32.mxu0 0.0
    %259 = vmatmul.mubr.f32.gmra.mxu0 %v153
    %v260 = vpop.f32.mrf.mxu0
    %v261 = vadd.f32 0.0, %v260
    %v262 = vpop.f32.mrf.mxu0
    %263 = vdwg.mxu0
    %v266 = vunpack.c.l.s4 1966171168
    %v267 = vunpack.c.0.s8 %v266
    %v268 = vlaneseq
    %v269 = vshrl.u32 %v268, 7
    %v270 = vsub.s32 %v267, %v269
    %v271 = vrot.slane %v111, %v270
    %v272 = vcombine.high %v271, %v271
    %v274 = vunpack.c.l.s4 1966171168
    %v275 = vunpack.c.0.s8 %v274
    %v276 = vlaneseq
    %v277 = vshrl.u32 %v276, 7
    %v278 = vsub.s32 %v275, %v277
    %v279 = vrot.slane %v271, %v278
    %v281 = vunpack.c.l.s4 1966171168
    %v282 = vunpack.c.0.s8 %v281
    %v283 = vlaneseq
    %v284 = vshrl.u32 %v283, 7
    %v285 = vsub.s32 %v282, %v284
    %v286 = vrot.slane %v272, %v285
    %v287 = vlaneseq
    %v288 = vshrl.u32 %v287, 7
    %v289 = vsub.s32 0, %v288
    %v290 = vrot.slane %v279, %v289
    %v291 = vlaneseq
    %v292 = vshrl.u32 %v291, 7
    %v293 = vsub.s32 0, %v292
    %v294 = vrot.slane %v286, %v293
    %v297 = vadd.f32 %v290, %v226
    %v298 = vadd.f32 %v290, %v231
    %v299 = vadd.f32 %v290, %v236
    %v300 = vadd.f32 %v290, %v241
    %v301 = vadd.f32 %v294, %v246
    %v302 = vadd.f32 %v294, %v251
    %v303 = vadd.f32 %v294, %v256
    %v304 = vadd.f32 %v294, %v261
    %v305 = vld [vmem:[%s1] sm:$0xff]
    %v306 = vld [vmem:[%s1 + $0x8] sm:$0xff]
    %v307 = vld [vmem:[%s1 + $0x10] sm:$0xff]
    %v308 = vld [vmem:[%s1 + $0x18] sm:$0xff]
    %v309 = vld [vmem:[%s1 + $0x20] sm:$0xff]
    %v310 = vld [vmem:[%s1 + $0x28] sm:$0xff]
    %v311 = vld [vmem:[%s1 + $0x30] sm:$0xff]
    %v312 = vld [vmem:[%s1 + $0x38] sm:$0xff]
    %v313 = vadd.f32 %v297, %v305
    %v314 = vadd.f32 %v298, %v306
    %v315 = vadd.f32 %v299, %v307
    %v316 = vadd.f32 %v300, %v308
    %v317 = vadd.f32 %v301, %v309
    %v318 = vadd.f32 %v302, %v310
    %v319 = vadd.f32 %v303, %v311
    %v320 = vadd.f32 %v304, %v312
    %v321 = vtanh.pop %v313
    %v322 = vtanh.pop %v314
    %v323 = vtanh.pop %v315
    %v324 = vtanh.pop %v316
    %v325 = vtanh.pop %v317
    %v326 = vtanh.pop %v318
    %v327 = vtanh.pop %v319
    %v328 = vtanh.pop %v320
    %v329 = vld [vmem:[%s6] sm:$0x1]
    %v331 = vlaneseq
    %v332 = vshrl.u32 %v331, 7
    %v333 = vsub.s32 0, %v332
    %v334 = vrot.slane %v329, %v333
    %v336 = vmul.f32 %v321, %v334
    %v337 = vmul.f32 %v322, %v334
    %v338 = vmul.f32 %v323, %v334
    %v339 = vmul.f32 %v324, %v334
    %v340 = vmul.f32 %v325, %v334
    %v341 = vmul.f32 %v326, %v334
    %v342 = vmul.f32 %v327, %v334
    %v343 = vmul.f32 %v328, %v334
    %vm344 = vcmask 523264
    %v345 = vsel %vm344, %v336, 0.0
    %346 = vadd.xlane.f32.xlu0 %v345
    %v347 = vpop.xlane.xlu0 %346
    %v348 = vsel %vm344, %v337, 0.0
    %349 = vadd.xlane.f32.xlu0 %v348
    %v350 = vpop.xlane.xlu0 %349
    %v351 = vsel %vm344, %v338, 0.0
    %352 = vadd.xlane.f32.xlu0 %v351
    %v353 = vpop.xlane.xlu0 %352
    %v354 = vsel %vm344, %v339, 0.0
    %355 = vadd.xlane.f32.xlu0 %v354
    %v356 = vpop.xlane.xlu0 %355
    %v357 = vsel %vm344, %v340, 0.0
    %358 = vadd.xlane.f32.xlu0 %v357
    %v359 = vpop.xlane.xlu0 %358
    %v360 = vsel %vm344, %v341, 0.0
    %361 = vadd.xlane.f32.xlu0 %v360
    %v362 = vpop.xlane.xlu0 %361
    %v363 = vsel %vm344, %v342, 0.0
    %364 = vadd.xlane.f32.xlu0 %v363
    %v365 = vpop.xlane.xlu0 %364
    %v366 = vsel %vm344, %v343, 0.0
    %367 = vadd.xlane.f32.xlu0 %v366
    %v368 = vpop.xlane.xlu0 %367
    %v369 = vld [vmem:[%s3] sm:$0x3]
    %vm370 = vcmp.gt.f32.partialorder %v369, 0.5
    %v379 = vlaneseq
    %v380 = vand.u32 %v379, 127
    %v381 = vlaneseq
    %v382 = vshrl.u32 %v381, 7
    %v383 = vsub.s32 %v380, %v382
    %v384 = vrot.slane %v347, %v383
    %v385 = vadd.s32 %v380, 4294967288
    %v386 = vlaneseq
    %v387 = vshrl.u32 %v386, 7
    %v388 = vsub.s32 %v385, %v387
    %v389 = vrot.slane %v350, %v388
    %vm390 = vcmask 130112
    %v391 = vsel %vm390, %v389, %v384
    %v392 = vadd.s32 %v380, 4294967280
    %v393 = vlaneseq
    %v394 = vshrl.u32 %v393, 7
    %v395 = vsub.s32 %v392, %v394
    %v396 = vrot.slane %v353, %v395
    %vm397 = vcmask 195712
    %v398 = vsel %vm397, %v396, %v391
    %v399 = vadd.s32 %v380, 4294967272
    %v400 = vlaneseq
    %v401 = vshrl.u32 %v400, 7
    %v402 = vsub.s32 %v399, %v401
    %v403 = vrot.slane %v356, %v402
    %vm404 = vcmask 261312
    %v405 = vsel %vm404, %v403, %v398
    %v406 = vlaneseq
    %v407 = vshrl.u32 %v406, 7
    %v408 = vsub.s32 %v380, %v407
    %v409 = vrot.slane %v359, %v408
    %v410 = vlaneseq
    %v411 = vshrl.u32 %v410, 7
    %v412 = vsub.s32 %v385, %v411
    %v413 = vrot.slane %v362, %v412
    %v414 = vsel %vm390, %v413, %v409
    %v415 = vlaneseq
    %v416 = vshrl.u32 %v415, 7
    %v417 = vsub.s32 %v392, %v416
    %v418 = vrot.slane %v365, %v417
    %v419 = vsel %vm397, %v418, %v414
    %v420 = vlaneseq
    %v421 = vshrl.u32 %v420, 7
    %v422 = vsub.s32 %v399, %v421
    %v423 = vrot.slane %v368, %v422
    %v424 = vsel %vm404, %v423, %v419
    %vm425 = vcmask 1041409
    %v426 = vsel %vm425, %v424, %v405
    %v428 = vsel %vm370, %v426, -1e+30
    %vm429 = vcmask 254976
    %v430 = vsel %vm429, %v428, -inf
    %431 = vmax.xlane.f32.xlu0 %v430
    %v432 = vpop.xlane.xlu0 %431
    %v433 = vsub.f32 %v428, %v432
    %v434 = vmul.f32 %v433, 1.442695
    %v435 = vpow.pop %v434
    %v436 = vsel %vm429, %v435, 0.0
    %437 = vadd.xlane.f32.xlu0 %v436
    %v438 = vpop.xlane.xlu0 %437
    %v439 = vrcp.pop %v438
    %v440 = vmul.f32 %v435, %v439
    %441 = vst.msk [vmem:[#allocation2] sm:$0x3] %vm429, %v440
    // Predicated region
    $region30: #{attention_forward.1} parent=1 // pred_check
      _
    $region31: #{attention_forward.1} parent=1 // pred_check_branch
      %443 = sbr.rel (0) target = $region33
    $region32: #{attention_forward.1} parent=1 // pred_region
      %s445 = ssub.s32 32, 32
      %446 = vsyncadd [#allocation3], %s445
      %s448 = sshll.u32 [#allocation2], 4
      %s449 = int_to_ptr.vmem [resolvable:$true] %s448
      %451 = dma.vmem_to_hbm [thread:$0]  %s449, 32, %s7, [#allocation3]
    $region33: #{attention_forward.1} parent=1 // pred_fallthru
      _
    // Predicated region
    $region34: #{attention_forward.1} parent=1 // pred_check
      _
    $region35: #{attention_forward.1} parent=1 // pred_check_branch
      %453 = sbr.rel (0) target = $region37
    $region36: #{attention_forward.1} parent=1 // pred_region
      %454 = dma.done [#allocation3], 32
    $region37: #{attention_forward.1} parent=1 // pred_fallthru
      _
    %455 = vsyncpa [#allocation3], 1

</llo_original>
